<compile_context>
chip_gen: v5e
topology: v5e:2x2
jax: 0.10.0
libtpu: 0.0.40
codegen_flags: <defaults>
</compile_context>

<pallas_src>
import numpy as np
import jax
import jax.numpy as jnp
from jax.experimental import pallas as pl
from jax.experimental.pallas import tpu as pltpu

LRELU_SLOPE = 0.2


def gp_kernel(alpha_ref, real_ref, fake_ref, feat_ref,
              w1t_ref, wft_ref, negb1_ref, w2p_ref, w2n_ref, w1_ref,
              out_ref):
    b = pl.program_id(0)
    a = alpha_ref[b]                               # per-sample alpha (SMEM, f32)

    real = real_ref[0]                             # (C,  HWt)  f32, lane-dense
    fake = fake_ref[0]                             # (C,  HWt)  f32
    feat = feat_ref[0]                             # (Cf, HWt)  f32

    # t = alpha*real - (1-alpha)*fake   (exact PyTorch semantics, incl. minus).
    # f32 VPU path so it also lowers on v5e (no bf16 VALUs there).
    t = a * real - (1.0 - a) * fake                # (C, HWt)

    # bf16 operands for the MXU, f32 accumulation.
    t_bf = t.astype(jnp.bfloat16)
    f_bf = feat.astype(jnp.bfloat16)

    # Discriminator pre-activation WITHOUT bias: only its sign vs -b1 is
    # ever needed for the analytic gradient.
    pre_nb = (jnp.dot(w1t_ref[...], t_bf, preferred_element_type=jnp.float32)
              + jnp.dot(wft_ref[...], f_bf, preferred_element_type=jnp.float32))

    # Analytic grad of Dt[b] = (1/HW) * sum_p lrelu(pre[:,p]) . w2 :
    #   dDt/dt = W1 @ (lrelu'(pre) * w2 / HW)
    # slope + 1/HW folded on the host into w2p / w2n.
    gpre = jnp.where(pre_nb > negb1_ref[...], w2p_ref[...], w2n_ref[...])   # (K, HWt) f32
    grads = jnp.dot(w1_ref[...], gpre.astype(jnp.bfloat16),
                    preferred_element_type=jnp.float32)                     # (C, HWt) f32

    # ||grads||_2 over the channel dim (== PyTorch dim=1 in NCHW).
    nsq = jnp.sum(grads * grads, axis=0, keepdims=True)                     # (1, HWt)
    d = jnp.sqrt(nsq) - 1.0
    sq = d * d                                                              # (1, HWt)

    # Lane-dense partial: fold HWt down to 128 lanes with VPU adds of
    # lane-aligned 128-wide chunks (no cross-lane XLU reduce per step).
    hwt = sq.shape[1]
    partial = sq[:, 0:128]
    for i in range(1, hwt // 128):
        partial = partial + sq[:, i * 128:(i + 1) * 128]
    out_ref[0] = partial                                                    # (1, 128)


def _pick_hw_tile(hw, cap):
    """Largest multiple of 128 that divides hw and is <= cap."""
    t = min(hw, cap)
    t -= t % 128
    while hw % t:
        t -= 128
    return t


def gradient_penalty(real, fake, f, alpha, params, lam, hw_tile_cap=2048):
    """real, fake: (B, C, H, W); f: (B, Cf, H, W)  (NCHW, like PyTorch)."""
    w1, wf, b1, w2 = params                        # (C,K),(Cf,K),(1,K),(1,K)
    B, C, H, W = real.shape
    Cf = f.shape[1]
    HW = H * W
    K = w1.shape[1]
    assert HW % 128 == 0, "H*W must be a multiple of 128 for the lane layout"

    # hw_tile_cap=2048 keeps per-step VMEM small enough for v7x's 64 MiB even
    # at realistic channel counts; raise it (plus vmem_limit_bytes) on
    # v5e/v6e (128 MiB) if profiling shows step-overhead exposed.
    HWt = _pick_hw_tile(HW, hw_tile_cap)
    T = HW // HWt

    # Free, contiguous reshape — no transpose pass and NO dtype cast in the
    # wrapper: f32 inputs are DMA'd as-is (single HBM read per element).
    real_l = real.reshape(B, C, HW)
    fake_l = fake.reshape(B, C, HW)
    feat_l = f.reshape(B, Cf, HW)

    # Host-side weight prep (tiny, done once): pre-transposed bf16 MXU
    # operands; lrelu' slope and 1/HW mean factor folded into w2; bias
    # folded into the select threshold.
    w1t = jnp.asarray(w1.T, jnp.bfloat16)                      # (K, C)
    wft = jnp.asarray(wf.T, jnp.bfloat16)                      # (K, Cf)
    w1c = jnp.asarray(w1, jnp.bfloat16)                        # (C, K)
    negb1 = jnp.asarray(-b1.reshape(K, 1), jnp.float32)        # (K, 1)
    w2p = jnp.asarray(w2.reshape(K, 1) / HW, jnp.float32)      # (K, 1)   w2/HW
    w2n = jnp.asarray(w2p * LRELU_SLOPE, jnp.float32)          # (K, 1)   0.2*w2/HW

    partials = pl.pallas_call(
        gp_kernel,
        out_shape=jax.ShapeDtypeStruct((B * T, 1, 128), jnp.float32),
        grid=(B, T),
        in_specs=[
            pl.BlockSpec(memory_space=pltpu.MemorySpace.SMEM),    # alpha (B,)
            pl.BlockSpec((1, C, HWt), lambda b, t: (b, 0, t)),    # real  f32
            pl.BlockSpec((1, C, HWt), lambda b, t: (b, 0, t)),    # fake  f32
            pl.BlockSpec((1, Cf, HWt), lambda b, t: (b, 0, t)),   # feat  f32
            pl.BlockSpec((K, C), lambda b, t: (0, 0)),            # W1ᵀ   bf16
            pl.BlockSpec((K, Cf), lambda b, t: (0, 0)),           # Wfᵀ   bf16
            pl.BlockSpec((K, 1), lambda b, t: (0, 0)),            # -b1   f32
            pl.BlockSpec((K, 1), lambda b, t: (0, 0)),            # w2/HW
            pl.BlockSpec((K, 1), lambda b, t: (0, 0)),            # 0.2*w2/HW
            pl.BlockSpec((C, K), lambda b, t: (0, 0)),            # W1    bf16
        ],
        out_specs=pl.BlockSpec((1, 1, 128), lambda b, t: (b * T + t, 0, 0)),
        compiler_params=pltpu.CompilerParams(
            dimension_semantics=("parallel", "parallel")),  # both TCs on v7x
    )(alpha, real_l, fake_l, feat_l, w1t, wft, negb1, w2p, w2n, w1c)

    # Final reduce + scale outside the kernel (single tiny XLA reduction).
    return (lam / (B * HW)) * jnp.sum(partials)


def reference_loss(real, fake, f, alpha, params, lam):
    """Pure-JAX reference using autodiff (mirrors torch.autograd.grad), f32."""
    w1, wf, b1, w2 = params
    B, C, H, W = real.shape
    HW = H * W
    real_l = real.reshape(B, C, HW)
    fake_l = fake.reshape(B, C, HW)
    feat_l = f.reshape(B, f.shape[1], HW)
    a = alpha[:, None, None]
    t = a * real_l - (1.0 - a) * fake_l

    def D(t_):
        pre = (jnp.einsum('ck,bcp->bkp', w1, t_)
               + jnp.einsum('ck,bcp->bkp', wf, feat_l)
               + b1.reshape(1, -1, 1))
        h = jnp.where(pre > 0, pre, LRELU_SLOPE * pre)
        return jnp.mean(jnp.einsum('bkp,k->bp', h, w2.reshape(-1)), axis=1)

    grads = jax.grad(lambda t_: jnp.sum(D(t_)))(t)            # (B, C, HW)
    nrm = jnp.sqrt(jnp.sum(grads ** 2, axis=1))               # (B, HW)
    return lam * jnp.mean((nrm - 1.0) ** 2)


if __name__ == "__main__":
    B, C, H, W = 2, 4, 16, 16
    Cf, K = 8, 32
    lam = 10.0

    key = jax.random.PRNGKey(0)
    k = jax.random.split(key, 8)
    real = jax.random.normal(k[0], (B, C, H, W), jnp.float32)
    fake = jax.random.normal(k[1], (B, C, H, W), jnp.float32)
    f = jax.random.normal(k[2], (B, Cf, H, W), jnp.float32)
    # torch.rand((B, 1, 1, 1)) -> one uniform alpha per sample, passed in for
    # determinism instead of drawn inside the module.
    alpha = jax.random.uniform(k[3], (B,), jnp.float32)

    # Deterministic synthetic discriminator parameters.
    w1 = jax.random.normal(k[4], (C, K), jnp.float32) / jnp.sqrt(C)
    wf = jax.random.normal(k[5], (Cf, K), jnp.float32) / jnp.sqrt(Cf)
    b1 = jax.random.normal(k[6], (1, K), jnp.float32) * 0.1
    w2 = jax.random.normal(k[7], (1, K), jnp.float32) / jnp.sqrt(K)
    params = (w1, wf, b1, w2)

    loss = gradient_penalty(real, fake, f, alpha, params, lam)
    loss = jax.block_until_ready(loss)

    ref = reference_loss(real, fake, f, alpha, params, lam)
    np.testing.assert_allclose(np.asarray(loss), np.asarray(ref),
                               rtol=1e-2, atol=1e-3)
    print("KERNEL_OK")
</pallas_src>

<mosaic_0001>
module attributes {stable_mosaic.version = 11 : i64} {
  func.func @gp_kernel(%arg0: i32, %arg1: i32, %arg2: memref<2xf32, #tpu.memory_space<smem>>, %arg3: memref<1x4x256xf32, #tpu.memory_space<vmem>>, %arg4: memref<1x4x256xf32, #tpu.memory_space<vmem>>, %arg5: memref<1x8x256xf32, #tpu.memory_space<vmem>>, %arg6: memref<32x4xbf16, #tpu.memory_space<vmem>>, %arg7: memref<32x8xbf16, #tpu.memory_space<vmem>>, %arg8: memref<32x1xf32, #tpu.memory_space<vmem>>, %arg9: memref<32x1xf32, #tpu.memory_space<vmem>>, %arg10: memref<32x1xf32, #tpu.memory_space<vmem>>, %arg11: memref<4x32xbf16, #tpu.memory_space<vmem>>, %arg12: memref<1x1x128xf32, #tpu.memory_space<vmem>>) attributes {dimension_semantics = [#tpu.dimension_semantics<parallel>, #tpu.dimension_semantics<parallel>], iteration_bounds = array<i64: 2, 1>, scalar_prefetch = 0 : i64, scratch_operands = 0 : i64, tpu.core_type = #tpu.core_type<tc>, window_params = [{transform_indices = @transform_0, window_bounds = array<i64: 2>}, {transform_indices = @transform_1, window_bounds = array<i64: 1, 4, 256>}, {transform_indices = @transform_2, window_bounds = array<i64: 1, 4, 256>}, {transform_indices = @transform_3, window_bounds = array<i64: 1, 8, 256>}, {pipeline_mode = #tpu.pipeline_mode<synchronous>, transform_indices = @transform_4, window_bounds = array<i64: 32, 4>}, {pipeline_mode = #tpu.pipeline_mode<synchronous>, transform_indices = @transform_5, window_bounds = array<i64: 32, 8>}, {pipeline_mode = #tpu.pipeline_mode<synchronous>, transform_indices = @transform_6, window_bounds = array<i64: 32, 1>}, {pipeline_mode = #tpu.pipeline_mode<synchronous>, transform_indices = @transform_7, window_bounds = array<i64: 32, 1>}, {pipeline_mode = #tpu.pipeline_mode<synchronous>, transform_indices = @transform_8, window_bounds = array<i64: 32, 1>}, {pipeline_mode = #tpu.pipeline_mode<synchronous>, transform_indices = @transform_9, window_bounds = array<i64: 4, 32>}, {transform_indices = @transform_10, window_bounds = array<i64: 1, 1, 128>}]} {
    %0 = arith.index_cast %arg0 : i32 to index
    %1 = memref.load %arg2[%0] : memref<2xf32, #tpu.memory_space<smem>>
    %c0 = arith.constant 0 : index
    %c0_0 = arith.constant 0 : index
    %c0_1 = arith.constant 0 : index
    %2 = vector.load %arg3[%c0, %c0_0, %c0_1] : memref<1x4x256xf32, #tpu.memory_space<vmem>>, vector<1x4x256xf32>
    %3 = vector.shape_cast %2 : vector<1x4x256xf32> to vector<4x256xf32>
    %c0_2 = arith.constant 0 : index
    %c0_3 = arith.constant 0 : index
    %c0_4 = arith.constant 0 : index
    %4 = vector.load %arg4[%c0_2, %c0_3, %c0_4] : memref<1x4x256xf32, #tpu.memory_space<vmem>>, vector<1x4x256xf32>
    %5 = vector.shape_cast %4 : vector<1x4x256xf32> to vector<4x256xf32>
    %c0_5 = arith.constant 0 : index
    %c0_6 = arith.constant 0 : index
    %c0_7 = arith.constant 0 : index
    %6 = vector.load %arg5[%c0_5, %c0_6, %c0_7] : memref<1x8x256xf32, #tpu.memory_space<vmem>>, vector<1x8x256xf32>
    %7 = vector.shape_cast %6 : vector<1x8x256xf32> to vector<8x256xf32>
    %8 = vector.broadcast %1 : f32 to vector<4x256xf32>
    %9 = arith.mulf %8, %3 : vector<4x256xf32>
    %cst = arith.constant 1.000000e+00 : f32
    %10 = arith.subf %cst, %1 : f32
    %11 = vector.broadcast %10 : f32 to vector<4x256xf32>
    %12 = arith.mulf %11, %5 : vector<4x256xf32>
    %13 = arith.subf %9, %12 : vector<4x256xf32>
    %14 = arith.truncf %13 : vector<4x256xf32> to vector<4x256xbf16>
    %15 = arith.truncf %7 : vector<8x256xf32> to vector<8x256xbf16>
    %c0_8 = arith.constant 0 : index
    %c0_9 = arith.constant 0 : index
    %16 = vector.load %arg6[%c0_8, %c0_9] : memref<32x4xbf16, #tpu.memory_space<vmem>>, vector<32x4xbf16>
    %cst_10 = arith.constant dense<0.000000e+00> : vector<32x256xf32>
    %17 = tpu.matmul %16, %14, %cst_10 {dimension_numbers = #tpu.dot_dimension_numbers<[1], [0], [0], [1], [0, 0, 1, 1], [], []>} : vector<32x4xbf16>, vector<4x256xbf16>, vector<32x256xf32> -> vector<32x256xf32>
    %c0_11 = arith.constant 0 : index
    %c0_12 = arith.constant 0 : index
    %18 = vector.load %arg7[%c0_11, %c0_12] : memref<32x8xbf16, #tpu.memory_space<vmem>>, vector<32x8xbf16>
    %cst_13 = arith.constant dense<0.000000e+00> : vector<32x256xf32>
    %19 = tpu.matmul %18, %15, %cst_13 {dimension_numbers = #tpu.dot_dimension_numbers<[1], [0], [0], [1], [0, 0, 1, 1], [], []>} : vector<32x8xbf16>, vector<8x256xbf16>, vector<32x256xf32> -> vector<32x256xf32>
    %20 = arith.addf %17, %19 : vector<32x256xf32>
    %c0_14 = arith.constant 0 : index
    %c0_15 = arith.constant 0 : index
    %21 = vector.load %arg8[%c0_14, %c0_15] : memref<32x1xf32, #tpu.memory_space<vmem>>, vector<32x1xf32>
    %22 = vector.broadcast %21 : vector<32x1xf32> to vector<32x256xf32>
    %23 = arith.cmpf ogt, %20, %22 : vector<32x256xf32>
    %c0_16 = arith.constant 0 : index
    %c0_17 = arith.constant 0 : index
    %24 = vector.load %arg9[%c0_16, %c0_17] : memref<32x1xf32, #tpu.memory_space<vmem>>, vector<32x1xf32>
    %c0_18 = arith.constant 0 : index
    %c0_19 = arith.constant 0 : index
    %25 = vector.load %arg10[%c0_18, %c0_19] : memref<32x1xf32, #tpu.memory_space<vmem>>, vector<32x1xf32>
    %26 = vector.shape_cast %24 : vector<32x1xf32> to vector<32x1xf32>
    %27 = vector.broadcast %26 : vector<32x1xf32> to vector<32x256xf32>
    %28 = vector.shape_cast %25 : vector<32x1xf32> to vector<32x1xf32>
    %29 = vector.broadcast %28 : vector<32x1xf32> to vector<32x256xf32>
    %30 = arith.select %23, %27, %29 : vector<32x256xi1>, vector<32x256xf32>
    %c0_20 = arith.constant 0 : index
    %c0_21 = arith.constant 0 : index
    %31 = vector.load %arg11[%c0_20, %c0_21] : memref<4x32xbf16, #tpu.memory_space<vmem>>, vector<4x32xbf16>
    %32 = arith.truncf %30 : vector<32x256xf32> to vector<32x256xbf16>
    %cst_22 = arith.constant dense<0.000000e+00> : vector<4x256xf32>
    %33 = tpu.matmul %31, %32, %cst_22 {dimension_numbers = #tpu.dot_dimension_numbers<[1], [0], [0], [1], [0, 0, 1, 1], [], []>} : vector<4x32xbf16>, vector<32x256xbf16>, vector<4x256xf32> -> vector<4x256xf32>
    %34 = arith.mulf %33, %33 : vector<4x256xf32>
    %cst_23 = arith.constant dense<0.000000e+00> : vector<256xf32>
    %35 = vector.multi_reduction <add>, %34, %cst_23 [0] : vector<4x256xf32> to vector<256xf32>
    %36 = vector.shape_cast %35 : vector<256xf32> to vector<1x256xf32>
    %37 = math.sqrt %36 : vector<1x256xf32>
    %cst_24 = arith.constant 1.000000e+00 : f32
    %38 = vector.broadcast %cst_24 : f32 to vector<1x256xf32>
    %39 = arith.subf %37, %38 : vector<1x256xf32>
    %40 = arith.mulf %39, %39 : vector<1x256xf32>
    %41 = vector.extract_strided_slice %40 {offsets = [0, 0], sizes = [1, 128], strides = [1, 1]} : vector<1x256xf32> to vector<1x128xf32>
    %42 = vector.extract_strided_slice %40 {offsets = [0, 128], sizes = [1, 128], strides = [1, 1]} : vector<1x256xf32> to vector<1x128xf32>
    %43 = arith.addf %41, %42 : vector<1x128xf32>
    %c0_25 = arith.constant 0 : index
    %c0_26 = arith.constant 0 : index
    %c0_27 = arith.constant 0 : index
    %44 = vector.load %arg12[%c0_25, %c0_26, %c0_27] : memref<1x1x128xf32, #tpu.memory_space<vmem>>, vector<1x1x128xf32>
    %45 = vector.shape_cast %44 : vector<1x1x128xf32> to vector<1x128xf32>
    %46 = vector.shape_cast %43 : vector<1x128xf32> to vector<1x1x128xf32>
    tpu.vector_store %arg12[%c0_25, %c0_26, %c0_27], %46 {strides = array<i32>} : memref<1x1x128xf32, #tpu.memory_space<vmem>>, vector<1x1x128xf32>,
    return
  }
  func.func @transform_0(%arg0: i32, %arg1: i32) -> i32 {
    %c0_i32 = arith.constant 0 : i32
    %c0_i32_0 = arith.constant 0 : i32
    return %c0_i32 : i32
  }
  func.func @transform_1(%arg0: i32, %arg1: i32) -> (i32, i32, i32) {
    %c0_i32 = arith.constant 0 : i32
    %c0_i32_0 = arith.constant 0 : i32
    return %arg0, %c0_i32, %arg1 : i32, i32, i32
  }
  func.func @transform_2(%arg0: i32, %arg1: i32) -> (i32, i32, i32) {
    %c0_i32 = arith.constant 0 : i32
    %c0_i32_0 = arith.constant 0 : i32
    return %arg0, %c0_i32, %arg1 : i32, i32, i32
  }
  func.func @transform_3(%arg0: i32, %arg1: i32) -> (i32, i32, i32) {
    %c0_i32 = arith.constant 0 : i32
    %c0_i32_0 = arith.constant 0 : i32
    return %arg0, %c0_i32, %arg1 : i32, i32, i32
  }
  func.func @transform_4(%arg0: i32, %arg1: i32) -> (i32, i32) {
    %c0_i32 = arith.constant 0 : i32
    %c0_i32_0 = arith.constant 0 : i32
    %c0_i32_1 = arith.constant 0 : i32
    return %c0_i32, %c0_i32_0 : i32, i32
  }
  func.func @transform_5(%arg0: i32, %arg1: i32) -> (i32, i32) {
    %c0_i32 = arith.constant 0 : i32
    %c0_i32_0 = arith.constant 0 : i32
    %c0_i32_1 = arith.constant 0 : i32
    return %c0_i32, %c0_i32_0 : i32, i32
  }
  func.func @transform_6(%arg0: i32, %arg1: i32) -> (i32, i32) {
    %c0_i32 = arith.constant 0 : i32
    %c0_i32_0 = arith.constant 0 : i32
    %c0_i32_1 = arith.constant 0 : i32
    return %c0_i32, %c0_i32_0 : i32, i32
  }
  func.func @transform_7(%arg0: i32, %arg1: i32) -> (i32, i32) {
    %c0_i32 = arith.constant 0 : i32
    %c0_i32_0 = arith.constant 0 : i32
    %c0_i32_1 = arith.constant 0 : i32
    return %c0_i32, %c0_i32_0 : i32, i32
  }
  func.func @transform_8(%arg0: i32, %arg1: i32) -> (i32, i32) {
    %c0_i32 = arith.constant 0 : i32
    %c0_i32_0 = arith.constant 0 : i32
    %c0_i32_1 = arith.constant 0 : i32
    return %c0_i32, %c0_i32_0 : i32, i32
  }
  func.func @transform_9(%arg0: i32, %arg1: i32) -> (i32, i32) {
    %c0_i32 = arith.constant 0 : i32
    %c0_i32_0 = arith.constant 0 : i32
    %c0_i32_1 = arith.constant 0 : i32
    return %c0_i32, %c0_i32_0 : i32, i32
  }
  func.func @transform_10(%arg0: i32, %arg1: i32) -> (i32, i32, i32) {
    %c1_i32 = arith.constant 1 : i32
    %0 = arith.muli %arg0, %c1_i32 : i32
    %1 = arith.addi %0, %arg1 : i32
    %c0_i32 = arith.constant 0 : i32
    %c0_i32_0 = arith.constant 0 : i32
    %c0_i32_1 = arith.constant 0 : i32
    return %1, %c0_i32, %c0_i32_0 : i32, i32, i32
  }
}

</mosaic_0001>

<llo_original>
// kernel: tpu_custom_call.1
$region0: #{tpu_custom_call.1}
  #allocation0 [shape = 'u32[]', space=smem, size = 0x4, offset = 0x4, fixed_abs, tag = 'smem constant byte address 0x4 - core index']
  #allocation1 [shape = 'u32[72,128]{1,0:T(1,128)}', space=vmem, size = 0x9000, scoped, tag = 'internal scratch']
  %s0 = inlined_call_operand.vmem [shape: f32[2], index: 0, kind: input, shape index: {}]
  %s1 = inlined_call_operand.vmem [shape: f32[2,4,256], index: 1, kind: input, shape index: {}]
  %s2 = inlined_call_operand.vmem [shape: f32[2,4,256], index: 2, kind: input, shape index: {}]
  %s3 = inlined_call_operand.vmem [shape: f32[2,8,256], index: 3, kind: input, shape index: {}]
  %s4 = inlined_call_operand.vmem [shape: bf16[32,4], index: 4, kind: input, shape index: {}]
  %s5 = inlined_call_operand.vmem [shape: bf16[32,8], index: 5, kind: input, shape index: {}]
  %s6 = inlined_call_operand.vmem [shape: f32[32,1], index: 6, kind: input, shape index: {}]
  %s7 = inlined_call_operand.vmem [shape: f32[32,1], index: 7, kind: input, shape index: {}]
  %s8 = inlined_call_operand.vmem [shape: f32[32,1], index: 8, kind: input, shape index: {}]
  %s9 = inlined_call_operand.vmem [shape: bf16[4,32], index: 9, kind: input, shape index: {}]
  %s10 = inlined_call_operand.hbm [shape: f32[2,1,128], index: 10, kind: output, shape index: {}]
  %s11 = sld [smem:[#allocation0]]
  $region77: #{tpu_custom_call.1} parent=0
    _
  %s13 = ssub.s32 1, %s11
  %s14 = scalar_select 0, %s13, %s11
  $region1: #{tpu_custom_call.1} parent=0
    #allocation2 [shape = 'u8[512]{0}', space=smem, size = 0x200, scoped, tag = 'input window, operand 0, single buffered']
    #allocation3 [shape = 's32[2]{0}', space=sflag, size = 0x8, scoped, tag = 'scoped memory for tpu_custom_call.1']
    #allocation4 [shape = 's32[2]{0}', space=sflag, size = 0x8, scoped, tag = 'scoped memory for tpu_custom_call.1']
    #allocation5 [shape = 'u8[1024]{0}', space=vmem, size = 0x400, scoped, tag = 'output window, operand 0']
    %15 = vsyncpa [#allocation4], 0
    %16 = vsyncpa [#allocation3], 0
    %s17 = scalar_lea.sflag [#allocation3], 1
    %18 = vsyncpa %s17, 0
    loop: start=0, step=1, limit=4
    $region2: #{tpu_custom_call.1} parent=1 // loop_pre_header
      _
    $region3: #{tpu_custom_call.1} parent=1 // loop_header
      %s20 = sphi 0, %s24
      %p21 = scmp.ge.s32.totalorder %s20, 4
      %s27 = sphi 0, %s39
      %s28 = sphi 0, %s35
      %s29 = sphi 0, %s27
      %s30 = sphi 0, %s28
      %s31 = sphi 0, %s29
      %s32 = sphi 0, %s30
      %s40 = sphi 0, %s40
      %s42 = sphi 0, %s40
      %s43 = sphi 0, %s42
      %s57 = sphi 0, %s43
      %s65 = sphi 0, %s67
      %s68 = sphi 0, %s65
      %s69 = sphi 0, %s68
      %s85 = sphi 0, %s69
      %s93 = sphi 0, %s95
      %s96 = sphi 0, %s93
      %s97 = sphi 0, %s96
      %s113 = sphi 0, %s97
      %s121 = sphi 0, %s123
      %s124 = sphi 0, %s121
      %s125 = sphi 0, %s124
      %s141 = sphi 0, %s125
      %s145 = sphi 0, %s145
      %s147 = sphi 0, %s145
      %s148 = sphi 0, %s147
      %s162 = sphi 0, %s148
      %s166 = sphi 0, %s166
      %s168 = sphi 0, %s166
      %s169 = sphi 0, %s168
      %s183 = sphi 0, %s169
      %s187 = sphi 0, %s187
      %s189 = sphi 0, %s187
      %s190 = sphi 0, %s189
      %s204 = sphi 0, %s190
      %s208 = sphi 0, %s208
      %s210 = sphi 0, %s208
      %s211 = sphi 0, %s210
      %s225 = sphi 0, %s211
      %s229 = sphi 0, %s229
      %s231 = sphi 0, %s229
      %s232 = sphi 0, %s231
      %s246 = sphi 0, %s232
      %s250 = sphi 0, %s250
      %s252 = sphi 0, %s250
      %s253 = sphi 0, %s252
      %s267 = sphi 0, %s253
      %s275 = sphi 0, %s277
      %s278 = sphi 0, %s275
      %s279 = sphi 0, %s278
      %s295 = sphi 0, %s279
    $region4: #{tpu_custom_call.1} parent=1 // loop_header_branch
      %23 = sbr.rel (%p21) target = $region8
    $region5: #{tpu_custom_call.1} parent=1 // loop_body
      %s25 = ssub.s32 %s20, 1
      %s26 = ssub.s32 %s20, 2
      %s33 = sadd.s32 1, %s28
      %p34 = scmp.ge.s32.totalorder %s33, 1
      %s35 = scalar_select %p34, 0, %s33
      %s36 = sadd.s32 1, %s27
      %s37 = scalar_select %p34, %s36, %s27
      %p38 = scmp.ge.s32.totalorder %s37, 2
      %s39 = scalar_select %p38, 0, %s37
      %s41 = sadd.s32 %s40, 1
      %p44 = scmp.eq.s32.totalorder %s20, 1
      %p45 = scmp.ne.s32.totalorder %s40, %s42
      %p46 = scmp.eq.s32.totalorder %s20, 0
      %p47 = por %p45, %p46
      %p48 = scmp.ne.s32.totalorder %s40, %s42
      %p49 = scmp.eq.s32.totalorder %s25, 1
      %p50 = por %p48, %p49
      %p51 = scmp.ne.s32.totalorder %s42, %s43
      %p52 = scmp.eq.s32.totalorder %s25, 0
      %p53 = por %p51, %p52
      %p54 = scmp.ne.s32.totalorder %s42, %s43
      %p55 = scmp.eq.s32.totalorder %s26, 1
      %p56 = por %p54, %p55
      %p58 = scmp.ne.s32.totalorder %s43, %s57
      %p59 = scmp.eq.s32.totalorder %s26, 0
      %p60 = por %p58, %p59
      %s61 = ssub.s32 %s27, %s39
      %s62 = ssub.s32 %s28, %s35
      %s63 = sor.u32 %s61, %s62
      %p64 = scmp.eq.s32.totalorder %s63, 0
      %s66 = sadd.s32 %s65, 1
      %s67 = scalar_select %p64, %s65, %s66
      %p70 = pneg %p64
      %p71 = scmp.eq.s32.totalorder %s20, 1
      %p72 = por %p70, %p71
      %p73 = scmp.ne.s32.totalorder %s65, %s68
      %p74 = scmp.eq.s32.totalorder %s20, 0
      %p75 = por %p73, %p74
      %p76 = scmp.ne.s32.totalorder %s65, %s68
      %p77 = scmp.eq.s32.totalorder %s25, 1
      %p78 = por %p76, %p77
      %p79 = scmp.ne.s32.totalorder %s68, %s69
      %p80 = scmp.eq.s32.totalorder %s25, 0
      %p81 = por %p79, %p80
      %p82 = scmp.ne.s32.totalorder %s68, %s69
      %p83 = scmp.eq.s32.totalorder %s26, 1
      %p84 = por %p82, %p83
      %p86 = scmp.ne.s32.totalorder %s69, %s85
      %p87 = scmp.eq.s32.totalorder %s26, 0
      %p88 = por %p86, %p87
      %s89 = ssub.s32 %s27, %s39
      %s90 = ssub.s32 %s28, %s35
      %s91 = sor.u32 %s89, %s90
      %p92 = scmp.eq.s32.totalorder %s91, 0
      %s94 = sadd.s32 %s93, 1
      %s95 = scalar_select %p92, %s93, %s94
      %p98 = pneg %p92
      %p99 = scmp.eq.s32.totalorder %s20, 1
      %p100 = por %p98, %p99
      %p101 = scmp.ne.s32.totalorder %s93, %s96
      %p102 = scmp.eq.s32.totalorder %s20, 0
      %p103 = por %p101, %p102
      %p104 = scmp.ne.s32.totalorder %s93, %s96
      %p105 = scmp.eq.s32.totalorder %s25, 1
      %p106 = por %p104, %p105
      %p107 = scmp.ne.s32.totalorder %s96, %s97
      %p108 = scmp.eq.s32.totalorder %s25, 0
      %p109 = por %p107, %p108
      %p110 = scmp.ne.s32.totalorder %s96, %s97
      %p111 = scmp.eq.s32.totalorder %s26, 1
      %p112 = por %p110, %p111
      %p114 = scmp.ne.s32.totalorder %s97, %s113
      %p115 = scmp.eq.s32.totalorder %s26, 0
      %p116 = por %p114, %p115
      %s117 = ssub.s32 %s27, %s39
      %s118 = ssub.s32 %s28, %s35
      %s119 = sor.u32 %s117, %s118
      %p120 = scmp.eq.s32.totalorder %s119, 0
      %s122 = sadd.s32 %s121, 1
      %s123 = scalar_select %p120, %s121, %s122
      %p126 = pneg %p120
      %p127 = scmp.eq.s32.totalorder %s20, 1
      %p128 = por %p126, %p127
      %p129 = scmp.ne.s32.totalorder %s121, %s124
      %p130 = scmp.eq.s32.totalorder %s20, 0
      %p131 = por %p129, %p130
      %p132 = scmp.ne.s32.totalorder %s121, %s124
      %p133 = scmp.eq.s32.totalorder %s25, 1
      %p134 = por %p132, %p133
      %p135 = scmp.ne.s32.totalorder %s124, %s125
      %p136 = scmp.eq.s32.totalorder %s25, 0
      %p137 = por %p135, %p136
      %p138 = scmp.ne.s32.totalorder %s124, %s125
      %p139 = scmp.eq.s32.totalorder %s26, 1
      %p140 = por %p138, %p139
      %p142 = scmp.ne.s32.totalorder %s125, %s141
      %p143 = scmp.eq.s32.totalorder %s26, 0
      %p144 = por %p142, %p143
      %s146 = sadd.s32 %s145, 1
      %p149 = scmp.eq.s32.totalorder %s20, 1
      %p150 = scmp.ne.s32.totalorder %s145, %s147
      %p151 = scmp.eq.s32.totalorder %s20, 0
      %p152 = por %p150, %p151
      %p153 = scmp.ne.s32.totalorder %s145, %s147
      %p154 = scmp.eq.s32.totalorder %s25, 1
      %p155 = por %p153, %p154
      %p156 = scmp.ne.s32.totalorder %s147, %s148
      %p157 = scmp.eq.s32.totalorder %s25, 0
      %p158 = por %p156, %p157
      %p159 = scmp.ne.s32.totalorder %s147, %s148
      %p160 = scmp.eq.s32.totalorder %s26, 1
      %p161 = por %p159, %p160
      %p163 = scmp.ne.s32.totalorder %s148, %s162
      %p164 = scmp.eq.s32.totalorder %s26, 0
      %p165 = por %p163, %p164
      %s167 = sadd.s32 %s166, 1
      %p170 = scmp.eq.s32.totalorder %s20, 1
      %p171 = scmp.ne.s32.totalorder %s166, %s168
      %p172 = scmp.eq.s32.totalorder %s20, 0
      %p173 = por %p171, %p172
      %p174 = scmp.ne.s32.totalorder %s166, %s168
      %p175 = scmp.eq.s32.totalorder %s25, 1
      %p176 = por %p174, %p175
      %p177 = scmp.ne.s32.totalorder %s168, %s169
      %p178 = scmp.eq.s32.totalorder %s25, 0
      %p179 = por %p177, %p178
      %p180 = scmp.ne.s32.totalorder %s168, %s169
      %p181 = scmp.eq.s32.totalorder %s26, 1
      %p182 = por %p180, %p181
      %p184 = scmp.ne.s32.totalorder %s169, %s183
      %p185 = scmp.eq.s32.totalorder %s26, 0
      %p186 = por %p184, %p185
      %s188 = sadd.s32 %s187, 1
      %p191 = scmp.eq.s32.totalorder %s20, 1
      %p192 = scmp.ne.s32.totalorder %s187, %s189
      %p193 = scmp.eq.s32.totalorder %s20, 0
      %p194 = por %p192, %p193
      %p195 = scmp.ne.s32.totalorder %s187, %s189
      %p196 = scmp.eq.s32.totalorder %s25, 1
      %p197 = por %p195, %p196
      %p198 = scmp.ne.s32.totalorder %s189, %s190
      %p199 = scmp.eq.s32.totalorder %s25, 0
      %p200 = por %p198, %p199
      %p201 = scmp.ne.s32.totalorder %s189, %s190
      %p202 = scmp.eq.s32.totalorder %s26, 1
      %p203 = por %p201, %p202
      %p205 = scmp.ne.s32.totalorder %s190, %s204
      %p206 = scmp.eq.s32.totalorder %s26, 0
      %p207 = por %p205, %p206
      %s209 = sadd.s32 %s208, 1
      %p212 = scmp.eq.s32.totalorder %s20, 1
      %p213 = scmp.ne.s32.totalorder %s208, %s210
      %p214 = scmp.eq.s32.totalorder %s20, 0
      %p215 = por %p213, %p214
      %p216 = scmp.ne.s32.totalorder %s208, %s210
      %p217 = scmp.eq.s32.totalorder %s25, 1
      %p218 = por %p216, %p217
      %p219 = scmp.ne.s32.totalorder %s210, %s211
      %p220 = scmp.eq.s32.totalorder %s25, 0
      %p221 = por %p219, %p220
      %p222 = scmp.ne.s32.totalorder %s210, %s211
      %p223 = scmp.eq.s32.totalorder %s26, 1
      %p224 = por %p222, %p223
      %p226 = scmp.ne.s32.totalorder %s211, %s225
      %p227 = scmp.eq.s32.totalorder %s26, 0
      %p228 = por %p226, %p227
      %s230 = sadd.s32 %s229, 1
      %p233 = scmp.eq.s32.totalorder %s20, 1
      %p234 = scmp.ne.s32.totalorder %s229, %s231
      %p235 = scmp.eq.s32.totalorder %s20, 0
      %p236 = por %p234, %p235
      %p237 = scmp.ne.s32.totalorder %s229, %s231
      %p238 = scmp.eq.s32.totalorder %s25, 1
      %p239 = por %p237, %p238
      %p240 = scmp.ne.s32.totalorder %s231, %s232
      %p241 = scmp.eq.s32.totalorder %s25, 0
      %p242 = por %p240, %p241
      %p243 = scmp.ne.s32.totalorder %s231, %s232
      %p244 = scmp.eq.s32.totalorder %s26, 1
      %p245 = por %p243, %p244
      %p247 = scmp.ne.s32.totalorder %s232, %s246
      %p248 = scmp.eq.s32.totalorder %s26, 0
      %p249 = por %p247, %p248
      %s251 = sadd.s32 %s250, 1
      %p254 = scmp.eq.s32.totalorder %s20, 1
      %p255 = scmp.ne.s32.totalorder %s250, %s252
      %p256 = scmp.eq.s32.totalorder %s20, 0
      %p257 = por %p255, %p256
      %p258 = scmp.ne.s32.totalorder %s250, %s252
      %p259 = scmp.eq.s32.totalorder %s25, 1
      %p260 = por %p258, %p259
      %p261 = scmp.ne.s32.totalorder %s252, %s253
      %p262 = scmp.eq.s32.totalorder %s25, 0
      %p263 = por %p261, %p262
      %p264 = scmp.ne.s32.totalorder %s252, %s253
      %p265 = scmp.eq.s32.totalorder %s26, 1
      %p266 = por %p264, %p265
      %p268 = scmp.ne.s32.totalorder %s253, %s267
      %p269 = scmp.eq.s32.totalorder %s26, 0
      %p270 = por %p268, %p269
      %s271 = sadd.s32 %s27, %s28
      %s272 = sadd.s32 %s39, %s35
      %s273 = ssub.s32 %s271, %s272
      %p274 = scmp.eq.s32.totalorder %s273, 0
      %s276 = sadd.s32 %s275, 1
      %s277 = scalar_select %p274, %s275, %s276
      %p280 = pneg %p274
      %p281 = scmp.eq.s32.totalorder %s20, 1
      %p282 = por %p280, %p281
      %p283 = scmp.ne.s32.totalorder %s275, %s278
      %p284 = scmp.eq.s32.totalorder %s20, 0
      %p285 = por %p283, %p284
      %p286 = scmp.ne.s32.totalorder %s275, %s278
      %p287 = scmp.eq.s32.totalorder %s25, 1
      %p288 = por %p286, %p287
      %p289 = scmp.ne.s32.totalorder %s278, %s279
      %p290 = scmp.eq.s32.totalorder %s25, 0
      %p291 = por %p289, %p290
      %p292 = scmp.ne.s32.totalorder %s278, %s279
      %p293 = scmp.eq.s32.totalorder %s26, 1
      %p294 = por %p292, %p293
      %p296 = scmp.ne.s32.totalorder %s279, %s295
      %p297 = scmp.eq.s32.totalorder %s26, 0
      %p298 = por %p296, %p297
      %p299 = scmp.le.s32.totalorder 1, %s20
      %p300 = scmp.lt.s32.totalorder %s20, 3
      %p301 = pnand %p299, %p300
      %p302 = pneg %p301
      // Predicated region
      $region9: #{tpu_custom_call.1} parent=5 // pred_check
        _
      $region10: #{tpu_custom_call.1} parent=5 // pred_check_branch
        %304 = sbr.rel (%p301) target = $region12
      $region11: #{tpu_custom_call.1} parent=5 // pred_region
        %s305 = ssub.s32 %s20, 1
        // Predicated region
        $region13: #{tpu_custom_call.1} parent=11 // pred_check
          %p306 = pneg %p53
        $region14: #{tpu_custom_call.1} parent=11 // pred_check_branch
          %308 = sbr.rel (%p306) target = $region16
        $region15: #{tpu_custom_call.1} parent=11 // pred_region
          %310 = vsyncadd [#allocation4], 0
          %s312 = sshll.u32 %s0, 4
          %s313 = int_to_ptr.vmem [resolvable:$true] %s312
          %315 = dma.vmem_to_smem %s313, 16, [#allocation2], [#allocation4]
        $region16: #{tpu_custom_call.1} parent=11 // pred_fallthru
          _
        // Predicated region
        $region17: #{tpu_custom_call.1} parent=11 // pred_check
          %p316 = pneg %p158
        $region18: #{tpu_custom_call.1} parent=11 // pred_check_branch
          %318 = sbr.rel (%p316) target = $region20
        $region19: #{tpu_custom_call.1} parent=11 // pred_region
          _
        $region20: #{tpu_custom_call.1} parent=11 // pred_fallthru
          _
        // Predicated region
        $region21: #{tpu_custom_call.1} parent=11 // pred_check
          %p319 = pneg %p179
        $region22: #{tpu_custom_call.1} parent=11 // pred_check_branch
          %321 = sbr.rel (%p319) target = $region24
        $region23: #{tpu_custom_call.1} parent=11 // pred_region
          _
        $region24: #{tpu_custom_call.1} parent=11 // pred_fallthru
          _
        // Predicated region
        $region25: #{tpu_custom_call.1} parent=11 // pred_check
          %p322 = pneg %p200
        $region26: #{tpu_custom_call.1} parent=11 // pred_check_branch
          %324 = sbr.rel (%p322) target = $region28
        $region27: #{tpu_custom_call.1} parent=11 // pred_region
          _
        $region28: #{tpu_custom_call.1} parent=11 // pred_fallthru
          _
        // Predicated region
        $region29: #{tpu_custom_call.1} parent=11 // pred_check
          %p325 = pneg %p221
        $region30: #{tpu_custom_call.1} parent=11 // pred_check_branch
          %327 = sbr.rel (%p325) target = $region32
        $region31: #{tpu_custom_call.1} parent=11 // pred_region
          _
        $region32: #{tpu_custom_call.1} parent=11 // pred_fallthru
          _
        // Predicated region
        $region33: #{tpu_custom_call.1} parent=11 // pred_check
          %p328 = pneg %p242
        $region34: #{tpu_custom_call.1} parent=11 // pred_check_branch
          %330 = sbr.rel (%p328) target = $region36
        $region35: #{tpu_custom_call.1} parent=11 // pred_region
          _
        $region36: #{tpu_custom_call.1} parent=11 // pred_fallthru
          _
        // Predicated region
        $region37: #{tpu_custom_call.1} parent=11 // pred_check
          %p331 = pneg %p263
        $region38: #{tpu_custom_call.1} parent=11 // pred_check_branch
          %333 = sbr.rel (%p331) target = $region40
        $region39: #{tpu_custom_call.1} parent=11 // pred_region
          _
        $region40: #{tpu_custom_call.1} parent=11 // pred_fallthru
          _
      $region12: #{tpu_custom_call.1} parent=5 // pred_fallthru
        _
      %p334 = scmp.lt.s32.totalorder %s20, 2
      // Predicated region
      $region41: #{tpu_custom_call.1} parent=5 // pred_check
        %p335 = pneg %p334
      $region42: #{tpu_custom_call.1} parent=5 // pred_check_branch
        %337 = sbr.rel (%p335) target = $region44
      $region43: #{tpu_custom_call.1} parent=5 // pred_region
        // Predicated region
        $region45: #{tpu_custom_call.1} parent=43 // pred_check
          %p338 = pneg %p75
        $region46: #{tpu_custom_call.1} parent=43 // pred_check_branch
          %340 = sbr.rel (%p338) target = $region48
        $region47: #{tpu_custom_call.1} parent=43 // pred_region
          %s341 = smul.u32 2, %s28
          %p342 = scmp.lt.s32.totalorder %s27, 1
          %s343 = scalar_select %p342, %s27, 1
          %p344 = scmp.lt.s32.totalorder %s341, 1
          %s345 = scalar_select %p344, %s341, 1
          %s346 = smul.addr %s343, 2
          %s347 = sadd.s32 %s345, %s346
          %s348 = smul.addr %s347, 4
          %s349 = scalar_lea.vmem %s1, %s348
          %s350 = smul.u32 2, %s28
        $region48: #{tpu_custom_call.1} parent=43 // pred_fallthru
          _
        // Predicated region
        $region49: #{tpu_custom_call.1} parent=43 // pred_check
          %p351 = pneg %p103
        $region50: #{tpu_custom_call.1} parent=43 // pred_check_branch
          %353 = sbr.rel (%p351) target = $region52
        $region51: #{tpu_custom_call.1} parent=43 // pred_region
          %s354 = smul.u32 2, %s28
          %p355 = scmp.lt.s32.totalorder %s27, 1
          %s356 = scalar_select %p355, %s27, 1
          %p357 = scmp.lt.s32.totalorder %s354, 1
          %s358 = scalar_select %p357, %s354, 1
          %s359 = smul.addr %s356, 2
          %s360 = sadd.s32 %s358, %s359
          %s361 = smul.addr %s360, 4
          %s362 = scalar_lea.vmem %s2, %s361
          %s363 = smul.u32 2, %s28
        $region52: #{tpu_custom_call.1} parent=43 // pred_fallthru
          _
        // Predicated region
        $region53: #{tpu_custom_call.1} parent=43 // pred_check
          %p364 = pneg %p131
        $region54: #{tpu_custom_call.1} parent=43 // pred_check_branch
          %366 = sbr.rel (%p364) target = $region56
        $region55: #{tpu_custom_call.1} parent=43 // pred_region
          %s367 = smul.u32 2, %s28
          %p368 = scmp.lt.s32.totalorder %s27, 1
          %s369 = scalar_select %p368, %s27, 1
          %p370 = scmp.lt.s32.totalorder %s367, 1
          %s371 = scalar_select %p370, %s367, 1
          %s372 = smul.addr %s369, 2
          %s373 = sadd.s32 %s371, %s372
          %s374 = smul.addr %s373, 8
          %s375 = scalar_lea.vmem %s3, %s374
          %s376 = smul.u32 2, %s28
        $region56: #{tpu_custom_call.1} parent=43 // pred_fallthru
          _
      $region44: #{tpu_custom_call.1} parent=5 // pred_fallthru
        _
      %p377 = scmp.le.s32.totalorder 1, %s20
      %p378 = scmp.lt.s32.totalorder %s20, 3
      %p379 = pnand %p377, %p378
      %p380 = pneg %p379
      // Predicated region
      $region57: #{tpu_custom_call.1} parent=5 // pred_check
        _
      $region58: #{tpu_custom_call.1} parent=5 // pred_check_branch
        %382 = sbr.rel (%p379) target = $region60
      $region59: #{tpu_custom_call.1} parent=5 // pred_region
        %s383 = ssub.s32 %s20, 1
        // Predicated region
        $region61: #{tpu_custom_call.1} parent=59 // pred_check
          %p384 = pneg %p53
        $region62: #{tpu_custom_call.1} parent=59 // pred_check_branch
          %386 = sbr.rel (%p384) target = $region64
        $region63: #{tpu_custom_call.1} parent=59 // pred_region
          %388 = dma.done [#allocation4], 16
        $region64: #{tpu_custom_call.1} parent=59 // pred_fallthru
          _
        %389 = sfence
        %p390 = pneg %p53
        %p391 = pneg %p50
        %s392 = smul.u32 2, %s30
        %p393 = scmp.lt.s32.totalorder %s29, 1
        %s394 = scalar_select %p393, %s29, 1
        %p395 = scmp.lt.s32.totalorder %s392, 1
        %s396 = scalar_select %p395, %s392, 1
        %s397 = smul.addr %s394, 2
        %s398 = sadd.s32 %s396, %s397
        %s399 = smul.addr %s398, 4
        %s400 = scalar_lea.vmem %s1, %s399
        %p401 = pneg %p81
        %p402 = pneg %p78
        %s403 = smul.u32 2, %s30
        %p404 = scmp.lt.s32.totalorder %s29, 1
        %s405 = scalar_select %p404, %s29, 1
        %p406 = scmp.lt.s32.totalorder %s403, 1
        %s407 = scalar_select %p406, %s403, 1
        %s408 = smul.addr %s405, 2
        %s409 = sadd.s32 %s407, %s408
        %s410 = smul.addr %s409, 4
        %s411 = scalar_lea.vmem %s2, %s410
        %p412 = pneg %p109
        %p413 = pneg %p106
        %s414 = smul.u32 2, %s30
        %p415 = scmp.lt.s32.totalorder %s29, 1
        %s416 = scalar_select %p415, %s29, 1
        %p417 = scmp.lt.s32.totalorder %s414, 1
        %s418 = scalar_select %p417, %s414, 1
        %s419 = smul.addr %s416, 2
        %s420 = sadd.s32 %s418, %s419
        %s421 = smul.addr %s420, 8
        %s422 = scalar_lea.vmem %s3, %s421
        %p423 = pneg %p137
        %p424 = pneg %p134
        %p425 = pneg %p158
        %p426 = pneg %p155
        %p427 = pneg %p179
        %p428 = pneg %p176
        %p429 = pneg %p200
        %p430 = pneg %p197
        %p431 = pneg %p221
        %p432 = pneg %p218
        %p433 = pneg %p242
        %p434 = pneg %p239
        %p435 = pneg %p263
        %p436 = pneg %p260
        %p437 = pneg %p291
        %p438 = pneg %p288
        %s439 = sand.u32 %s278, 1
        %s440 = scalar_lea.sflag [#allocation3], %s439
        %s441 = sand.u32 %s278, 1
        %s442 = scalar_lea.vmem [#allocation5], %s441
        %s443 = smul.u32 2, %s30
        %p444 = scmp.lt.s32.totalorder %s29, 1
        %s445 = scalar_select %p444, %s29, 1
        %p446 = scmp.lt.s32.totalorder %s443, 1
        %s447 = scalar_select %p446, %s443, 1
        %s448 = smul.addr %s445, 2
        %s449 = sadd.s32 %s447, %s448
        %s450 = smul.addr %s449, 4
        %s451 = scalar_lea.vmem %s1, %s450
        %s452 = smul.u32 2, %s30
        %s453 = smul.u32 2, %s30
        %p454 = scmp.lt.s32.totalorder %s29, 1
        %s455 = scalar_select %p454, %s29, 1
        %p456 = scmp.lt.s32.totalorder %s453, 1
        %s457 = scalar_select %p456, %s453, 1
        %s458 = smul.addr %s455, 2
        %s459 = sadd.s32 %s457, %s458
        %s460 = smul.addr %s459, 4
        %s461 = scalar_lea.vmem %s2, %s460
        %s462 = smul.u32 2, %s30
        %s463 = smul.u32 2, %s30
        %p464 = scmp.lt.s32.totalorder %s29, 1
        %s465 = scalar_select %p464, %s29, 1
        %p466 = scmp.lt.s32.totalorder %s463, 1
        %s467 = scalar_select %p466, %s463, 1
        %s468 = smul.addr %s465, 2
        %s469 = sadd.s32 %s467, %s468
        %s470 = smul.addr %s469, 8
        %s471 = scalar_lea.vmem %s3, %s470
        %s472 = smul.u32 2, %s30
        %s473 = sadd.s32 %s29, %s30
        %s475 = sld [smem:[#allocation2 + %s29]]
        %v476 = vld [vmem:[%s451] sm:$0xff]
        %v477 = vld [vmem:[%s461] sm:$0xff]
        %v478 = vld [vmem:[%s471] sm:$0xff]
        %v479 = vld [vmem:[%s471 + $0x8] sm:$0xff]
        %v480 = vstv %s475
        %v481 = vmul.f32 %v480, %v476
        %s482 = ssub.f32 1.0, %s475
        %v483 = vstv %s482
        %v484 = vmul.f32 %v483, %v477
        %v485 = vsub.f32 %v481, %v484
        %487 = vst [vmem:[#allocation1] ss:$2 sm:$0xff] %v485
        %v488 = vld.sshfl [vmem:[#allocation1] sm:$0xff pattern:$0x75316420]
        %v489 = vld.sshfl [vmem:[#allocation1 + $0x8] sm:$0xff pattern:$0x75316420]
        %v492 = vpack.c.bf16 %v488, %v488
        %v493 = vpack.c.bf16 %v489, %v489
        %v494 = vpack.c.bf16 %v478, %v478
        %v495 = vpack.c.bf16 %v479, %v479
        %v496 = vld [vmem:[%s4] sm:$0xf]
        %v497 = vld [vmem:[%s4 + $0x4] sm:$0xf]
        %v498 = vld [vmem:[%s4 + $0x8] sm:$0xf]
        %v499 = vld [vmem:[%s4 + $0xc] sm:$0xf]
        %v500 = vld [vmem:[%s5] sm:$0xf]
        %v501 = vld [vmem:[%s5 + $0x4] sm:$0xf]
        %v502 = vld [vmem:[%s5 + $0x8] sm:$0xf]
        %v503 = vld [vmem:[%s5 + $0xc] sm:$0xf]
        %v508 = vunpack.c.l.b16 %v500
        %v509 = vunpack.c.l.b16 %v501
        %v510 = vunpack.c.l.b16 %v502
        %v511 = vunpack.c.l.b16 %v503
        %v512 = vpack.c.b16 %v509, %v508
        %v513 = vpack.c.b16 %v511, %v510
        %vm514 = vcmask 64512
        %v516 = vsel %vm514, %v512, 0
        %v519 = vsel %vm514, %v513, 0
        %vm521 = vcmask 1043456
        %v523 = vsel %vm521, %v494, 0
        %v526 = vsel %vm521, %v495, 0
        %528 = vmatpush.bf16.msra.mxu0 0
        %529 = vmatpush.bf16.msra.mxu0 0
        %530 = vmatpush.bf16.msra.mxu0 0
        %531 = vmatpush.bf16.msra.mxu0 0
        %532 = vmatpush.bf16.msra.mxu0 0
        %533 = vmatpush.bf16.msra.mxu0 0
        %534 = vmatpush.bf16.msra.mxu0 0
        %535 = vmatpush.bf16.msra.mxu0 %v523
        %536 = vmatmul.bf16.gmra.mxu0 %v516
        %v537 = vpop.f32.mrf.mxu0
        %v538 = vadd.f32 0.0, %v537
        %v539 = vpop.f32.mrf.mxu0
        %v540 = vadd.f32 0.0, %v539
        %541 = vmatmul.bf16.gmra.mxu0 %v519
        %v542 = vpop.f32.mrf.mxu0
        %v543 = vadd.f32 0.0, %v542
        %v544 = vpop.f32.mrf.mxu0
        %v545 = vadd.f32 0.0, %v544
        %546 = vdwg.mxu0
        %547 = vmatpush.bf16.msra.mxu0 0
        %548 = vmatpush.bf16.msra.mxu0 0
        %549 = vmatpush.bf16.msra.mxu0 0
        %550 = vmatpush.bf16.msra.mxu0 0
        %551 = vmatpush.bf16.msra.mxu0 0
        %552 = vmatpush.bf16.msra.mxu0 0
        %553 = vmatpush.bf16.msra.mxu0 0
        %554 = vmatpush.bf16.msra.mxu0 %v526
        %555 = vmatmul.bf16.gmra.mxu0 %v516
        %v556 = vpop.f32.mrf.mxu0
        %v557 = vadd.f32 0.0, %v556
        %v558 = vpop.f32.mrf.mxu0
        %v559 = vadd.f32 0.0, %v558
        %560 = vmatmul.bf16.gmra.mxu0 %v519
        %v561 = vpop.f32.mrf.mxu0
        %v562 = vadd.f32 0.0, %v561
        %v563 = vpop.f32.mrf.mxu0
        %v564 = vadd.f32 0.0, %v563
        %565 = vdwg.mxu0
        %v570 = vunpack.c.l.b16 %v496
        %v571 = vunpack.c.l.b16 %v497
        %v572 = vunpack.c.l.b16 %v498
        %v573 = vunpack.c.l.b16 %v499
        %v574 = vpack.c.b16 %v571, %v570
        %v575 = vpack.c.b16 %v573, %v572
        %vm576 = vcmask 31744
        %v578 = vsel %vm576, %v574, 0
        %v581 = vsel %vm576, %v575, 0
        %vm583 = vcmask 1041408
        %v585 = vsel %vm583, %v492, 0
        %v588 = vsel %vm583, %v493, 0
        %590 = vmatpush.bf16.msra.mxu0 0
        %591 = vmatpush.bf16.msra.mxu0 0
        %592 = vmatpush.bf16.msra.mxu0 0
        %593 = vmatpush.bf16.msra.mxu0 0
        %594 = vmatpush.bf16.msra.mxu0 0
        %595 = vmatpush.bf16.msra.mxu0 0
        %596 = vmatpush.bf16.msra.mxu0 0
        %597 = vmatpush.bf16.msra.mxu0 %v585
        %598 = vmatmul.bf16.gmra.mxu0 %v578
        %v599 = vpop.f32.mrf.mxu0
        %v600 = vadd.f32 %v538, %v599
        %v601 = vpop.f32.mrf.mxu0
        %v602 = vadd.f32 %v540, %v601
        %603 = vmatmul.bf16.gmra.mxu0 %v581
        %v604 = vpop.f32.mrf.mxu0
        %v605 = vadd.f32 %v543, %v604
        %v606 = vpop.f32.mrf.mxu0
        %v607 = vadd.f32 %v545, %v606
        %608 = vdwg.mxu0
        %609 = vmatpush.bf16.msra.mxu0 0
        %610 = vmatpush.bf16.msra.mxu0 0
        %611 = vmatpush.bf16.msra.mxu0 0
        %612 = vmatpush.bf16.msra.mxu0 0
        %613 = vmatpush.bf16.msra.mxu0 0
        %614 = vmatpush.bf16.msra.mxu0 0
        %615 = vmatpush.bf16.msra.mxu0 0
        %616 = vmatpush.bf16.msra.mxu0 %v588
        %617 = vmatmul.bf16.gmra.mxu0 %v578
        %v618 = vpop.f32.mrf.mxu0
        %v619 = vadd.f32 %v557, %v618
        %v620 = vpop.f32.mrf.mxu0
        %v621 = vadd.f32 %v559, %v620
        %622 = vmatmul.bf16.gmra.mxu0 %v581
        %v623 = vpop.f32.mrf.mxu0
        %v624 = vadd.f32 %v562, %v623
        %v625 = vpop.f32.mrf.mxu0
        %v626 = vadd.f32 %v564, %v625
        %627 = vdwg.mxu0
        %v628 = vld [vmem:[%s6] sm:$0xff]
        %v629 = vld [vmem:[%s6 + $0x8] sm:$0xff]
        %v630 = vld [vmem:[%s6 + $0x10] sm:$0xff]
        %v631 = vld [vmem:[%s6 + $0x18] sm:$0xff]
        %633 = vset.pattern.permute.xlu0 0
        %634 = vperm.xlu0 %633, %v628
        %v635 = vpop.permute.xlu0 %634
        %638 = vset.pattern.permute.xlu0 0
        %639 = vperm.xlu0 %638, %v629
        %v640 = vpop.permute.xlu0 %639
        %643 = vset.pattern.permute.xlu0 0
        %644 = vperm.xlu0 %643, %v630
        %v645 = vpop.permute.xlu0 %644
        %648 = vset.pattern.permute.xlu0 0
        %649 = vperm.xlu0 %648, %v631
        %v650 = vpop.permute.xlu0 %649
        %vm652 = vcmp.gt.f32.partialorder %v600, %v635
        %vm653 = vcmp.gt.f32.partialorder %v619, %v635
        %vm654 = vcmp.gt.f32.partialorder %v602, %v640
        %vm655 = vcmp.gt.f32.partialorder %v621, %v640
        %vm656 = vcmp.gt.f32.partialorder %v605, %v645
        %vm657 = vcmp.gt.f32.partialorder %v624, %v645
        %vm658 = vcmp.gt.f32.partialorder %v607, %v650
        %vm659 = vcmp.gt.f32.partialorder %v626, %v650
        %v660 = vld [vmem:[%s7] sm:$0xff]
        %v661 = vld [vmem:[%s7 + $0x8] sm:$0xff]
        %v662 = vld [vmem:[%s7 + $0x10] sm:$0xff]
        %v663 = vld [vmem:[%s7 + $0x18] sm:$0xff]
        %v664 = vld [vmem:[%s8] sm:$0xff]
        %v665 = vld [vmem:[%s8 + $0x8] sm:$0xff]
        %v666 = vld [vmem:[%s8 + $0x10] sm:$0xff]
        %v667 = vld [vmem:[%s8 + $0x18] sm:$0xff]
        %669 = vset.pattern.permute.xlu0 0
        %670 = vperm.xlu0 %669, %v660
        %v671 = vpop.permute.xlu0 %670
        %674 = vset.pattern.permute.xlu0 0
        %675 = vperm.xlu0 %674, %v661
        %v676 = vpop.permute.xlu0 %675
        %679 = vset.pattern.permute.xlu0 0
        %680 = vperm.xlu0 %679, %v662
        %v681 = vpop.permute.xlu0 %680
        %684 = vset.pattern.permute.xlu0 0
        %685 = vperm.xlu0 %684, %v663
        %v686 = vpop.permute.xlu0 %685
        %689 = vset.pattern.permute.xlu0 0
        %690 = vperm.xlu0 %689, %v664
        %v691 = vpop.permute.xlu0 %690
        %694 = vset.pattern.permute.xlu0 0
        %695 = vperm.xlu0 %694, %v665
        %v696 = vpop.permute.xlu0 %695
        %699 = vset.pattern.permute.xlu0 0
        %700 = vperm.xlu0 %699, %v666
        %v701 = vpop.permute.xlu0 %700
        %704 = vset.pattern.permute.xlu0 0
        %705 = vperm.xlu0 %704, %v667
        %v706 = vpop.permute.xlu0 %705
        %v708 = vsel %vm652, %v671, %v691
        %v709 = vsel %vm653, %v671, %v691
        %v710 = vsel %vm654, %v676, %v696
        %v711 = vsel %vm655, %v676, %v696
        %v712 = vsel %vm656, %v681, %v701
        %v713 = vsel %vm657, %v681, %v701
        %v714 = vsel %vm658, %v686, %v706
        %v715 = vsel %vm659, %v686, %v706
        %v716 = vld [vmem:[%s9] sm:$0x3]
        %v717 = vpack.c.bf16 %v710, %v708
        %v718 = vpack.c.bf16 %v711, %v709
        %v719 = vpack.c.bf16 %v714, %v712
        %v720 = vpack.c.bf16 %v715, %v713
        %vm721 = vcmask 261120
        %v723 = vsel %vm721, %v716, 0
        %725 = vmatpush.bf16.msra.mxu0 0
        %726 = vmatpush.bf16.msra.mxu0 0
        %727 = vmatpush.bf16.msra.mxu0 0
        %728 = vmatpush.bf16.msra.mxu0 0
        %729 = vmatpush.bf16.msra.mxu0 0
        %730 = vmatpush.bf16.msra.mxu0 0
        %731 = vmatpush.bf16.msra.mxu0 %v719
        %732 = vmatpush.bf16.msra.mxu0 %v717
        %733 = vmatmul.bf16.gmra.mxu0 %v723
        %v734 = vpop.f32.mrf.mxu0
        %v735 = vadd.f32 0.0, %v734
        %v736 = vpop.f32.mrf.mxu0
        %737 = vdwg.mxu0
        %738 = vmatpush.bf16.msra.mxu0 0
        %739 = vmatpush.bf16.msra.mxu0 0
        %740 = vmatpush.bf16.msra.mxu0 0
        %741 = vmatpush.bf16.msra.mxu0 0
        %742 = vmatpush.bf16.msra.mxu0 0
        %743 = vmatpush.bf16.msra.mxu0 0
        %744 = vmatpush.bf16.msra.mxu0 %v720
        %745 = vmatpush.bf16.msra.mxu0 %v718
        %746 = vmatmul.bf16.gmra.mxu0 %v723
        %v747 = vpop.f32.mrf.mxu0
        %v748 = vadd.f32 0.0, %v747
        %v749 = vpop.f32.mrf.mxu0
        %750 = vdwg.mxu0
        %v751 = vmul.f32 %v735, %v735
        %v752 = vmul.f32 %v748, %v748
        %v753 = vsel %vm521, %v751, 0.0
        %v754 = vrot.slane %v753, 4
        %v755 = vadd.f32 %v753, %v754
        %v756 = vrot.slane %v755, 2
        %v757 = vadd.f32 %v755, %v756
        %v758 = vrot.slane %v757, 1
        %v759 = vadd.f32 %v757, %v758
        %v760 = vsel %vm521, %v752, 0.0
        %v761 = vrot.slane %v760, 4
        %v762 = vadd.f32 %v760, %v761
        %v763 = vrot.slane %v762, 2
        %v764 = vadd.f32 %v762, %v763
        %v765 = vrot.slane %v764, 1
        %v766 = vadd.f32 %v764, %v765
        %v767 = vrsqrt.pop %v759
        %v768 = vmul.f32 %v767, %v759
        %v769 = vmul.f32 %v768, %v767
        %v770 = vmul.f32 0.5, %v769
        %v771 = vsub.f32 1.5, %v770
        %v772 = vmul.f32 %v767, %v771
        %v773 = vmul.f32 %v759, %v772
        %vm774 = vcmp.eq.f32.partialorder %v759, inf
        %v775 = vsel %vm774, %v759, %v773
        %vm776 = vcmp.eq.f32.partialorder %v759, 0.0
        %v777 = vand.u32 %v759, 2147483648
        %v778 = vsel %vm776, %v777, %v775
        %v779 = vrsqrt.pop %v766
        %v780 = vmul.f32 %v779, %v766
        %v781 = vmul.f32 %v780, %v779
        %v782 = vmul.f32 0.5, %v781
        %v783 = vsub.f32 1.5, %v782
        %v784 = vmul.f32 %v779, %v783
        %v785 = vmul.f32 %v766, %v784
        %vm786 = vcmp.eq.f32.partialorder %v766, inf
        %v787 = vsel %vm786, %v766, %v785
        %vm788 = vcmp.eq.f32.partialorder %v766, 0.0
        %v789 = vand.u32 %v766, 2147483648
        %v790 = vsel %vm788, %v789, %v787
        %v791 = vsub.f32 %v778, 1.0
        %v792 = vsub.f32 %v790, 1.0
        %v793 = vmul.f32 %v791, %v791
        %v794 = vmul.f32 %v792, %v792
        %v795 = vadd.f32 %v793, %v794
        %796 = vst [vmem:[%s442] sm:$0x1] %v795
        %s797 = sand.u32 %s278, 1
        %s798 = scalar_lea.sflag [#allocation3], %s797
        %s799 = sand.u32 %s278, 1
        %s800 = scalar_lea.vmem [#allocation5], %s799
        // Predicated region
        $region65: #{tpu_custom_call.1} parent=59 // pred_check
          %p801 = pneg %p288
        $region66: #{tpu_custom_call.1} parent=59 // pred_check_branch
          %803 = sbr.rel (%p801) target = $region68
        $region67: #{tpu_custom_call.1} parent=59 // pred_region
          %s804 = sadd.s32 %s29, %s30
          %806 = vsyncadd %s798, 0
          %s807 = scalar_lea.hbm %s10, %s804
          %s809 = sshll.u32 %s800, 4
          %s810 = int_to_ptr.vmem [resolvable:$true] %s809
          %s811 = sshll.u32 %s807, 4
          %s812 = int_to_ptr.hbm [resolvable:$true] %s811
          %814 = dma.vmem_to_hbm [thread:$0]  %s810, 16, %s812, %s798
        $region68: #{tpu_custom_call.1} parent=59 // pred_fallthru
          _
      $region60: #{tpu_custom_call.1} parent=5 // pred_fallthru
        _
      %p815 = scmp.le.s32.totalorder 2, %s20
      // Predicated region
      $region69: #{tpu_custom_call.1} parent=5 // pred_check
        %p816 = pneg %p815
      $region70: #{tpu_custom_call.1} parent=5 // pred_check_branch
        %818 = sbr.rel (%p816) target = $region72
      $region71: #{tpu_custom_call.1} parent=5 // pred_region
        %s819 = ssub.s32 %s20, 2
        // Predicated region
        $region73: #{tpu_custom_call.1} parent=71 // pred_check
          %p820 = pneg %p294
        $region74: #{tpu_custom_call.1} parent=71 // pred_check_branch
          %822 = sbr.rel (%p820) target = $region76
        $region75: #{tpu_custom_call.1} parent=71 // pred_region
          %s823 = sand.u32 %s279, 1
          %s824 = scalar_lea.sflag [#allocation3], %s823
          %s825 = sand.u32 %s279, 1
          %s826 = scalar_lea.vmem [#allocation5], %s825
          %828 = dma.done %s824, 16
        $region76: #{tpu_custom_call.1} parent=71 // pred_fallthru
          _
      $region72: #{tpu_custom_call.1} parent=5 // pred_fallthru
        _
    $region6: #{tpu_custom_call.1} parent=1 // loop_footer
      %s24 = sadd.s32 1, %s20
    $region7: #{tpu_custom_call.1} parent=1 // loop_footer_branch
      %19 = sbr.rel target = $region3
    $region8: #{tpu_custom_call.1} parent=1 // loop_exit
      _
    %829 = vsyncpa [#allocation3], 1
    %s830 = scalar_lea.sflag [#allocation3], 1
    %831 = vsyncpa %s830, 1
    %832 = vsyncpa [#allocation4], 1
    %s833 = scalar_lea.sflag [#allocation4], 1
    %834 = vsyncpa %s833, 1

</llo_original>
